<compile_context>
chip_gen: v7x
topology: tpu7x:2x2x1
jax: 0.10.0
libtpu: 0.0.40
codegen_flags: <defaults>
</compile_context>

<pallas_src>
import functools

import jax
import jax.numpy as jnp
from jax.experimental import pallas as pl
from jax.experimental.pallas import tpu as pltpu


def _shift_w(x, delta):
    """y[:, j] = x[:, j + delta] with zero padding (delta in {-1, +1})."""
    h, w = x.shape
    z = jnp.zeros((h, 1), x.dtype)
    if delta == 1:
        return jnp.concatenate([x[:, 1:], z], axis=1)
    return jnp.concatenate([z, x[:, : w - 1]], axis=1)


def _shift_h(x, delta):
    """y[i, :] = x[i + delta, :] with zero padding (delta in {-1, +1})."""
    h, w = x.shape
    z = jnp.zeros((1, w), x.dtype)
    if delta == 1:
        return jnp.concatenate([x[1:, :], z], axis=0)
    return jnp.concatenate([z, x[: h - 1, :]], axis=0)


def _fused_kernel(C, H, W,
                  img1_ref, img2_ref,        # (1, C, H, W) VMEM blocks
                  wnf_ref,                   # (2, 2C) in SMEM (scalar weights)
                  wp_ref, bp_ref, wc_ref,    # posenet / cheirality weights (VMEM)
                  flow_ref, poses_ref):
    inv_hw = 1.0 / float(H * W)

    # Single streaming pass over channels: grayscale accumulation, 1x1-conv
    # flow (VPU broadcast-FMA with SMEM scalar weights), and pooled means for
    # the posenet stand-in.  No monolithic (C,H,W) value is ever materialized.
    gm = jnp.zeros((H, W), jnp.float32)
    flow0 = jnp.zeros((H, W), jnp.float32)
    flow1 = jnp.zeros((H, W), jnp.float32)
    pose = bp_ref[...]                                 # (1, 6)
    for c in range(C):                                 # unrolled at trace time (C tiny)
        x1c = img1_ref[0, c]                           # (H, W)
        x2c = img2_ref[0, c]
        gm = gm + x1c + x2c
        flow0 = flow0 + wnf_ref[0, c] * x1c + wnf_ref[0, C + c] * x2c
        flow1 = flow1 + wnf_ref[1, c] * x1c + wnf_ref[1, C + c] * x2c
        m1c = jnp.sum(jnp.sum(x1c, axis=1, keepdims=True),
                      axis=0, keepdims=True) * inv_hw          # (1, 1)
        m2c = jnp.sum(jnp.sum(x2c, axis=1, keepdims=True),
                      axis=0, keepdims=True) * inv_hw          # (1, 1)
        pose = pose + m1c * wp_ref[c:c + 1, :] + m2c * wp_ref[C + c:C + c + 1, :]

    gm = gm * (0.5 / C)            # = 0.5 * (mean_c(img1) + mean_c(img2))
    flow0 = jnp.tanh(flow0)
    flow1 = jnp.tanh(flow1)
    flow_ref[0, 0] = flow0
    flow_ref[0, 1] = flow1

    # Sobel gradients (zero padding, same coefficients as the torch reference),
    # as a separable 3-tap stencil: O(H*W) VPU work, no MXU, no band matrices.
    #   gx = [1,2,1]_rows (x) [-1,0,1]_cols   (cross-correlation)
    #   gy = [-1,0,1]_rows (x) [1,2,1]_cols
    gl = _shift_w(gm, -1)                     # gm[i, j-1]
    gr = _shift_w(gm, +1)                     # gm[i, j+1]
    dxc = gr - gl                             # horizontal central difference
    sxc = gl + 2.0 * gm + gr                  # horizontal smoothing
    gx = _shift_h(dxc, -1) + 2.0 * dxc + _shift_h(dxc, +1)
    gy = _shift_h(sxc, +1) - _shift_h(sxc, -1)

    # Cheirality stand-in: flow/gradient agreement -> small pose update.
    c0 = jnp.sum(jnp.sum(flow0 * gx, axis=1, keepdims=True),
                 axis=0, keepdims=True) * inv_hw                # (1, 1)
    c1 = jnp.sum(jnp.sum(flow1 * gy, axis=1, keepdims=True),
                 axis=0, keepdims=True) * inv_hw                # (1, 1)
    corr = c0 * wc_ref[0:1, :] + c1 * wc_ref[1:2, :]            # (1, 6)
    refined = pose + 0.01 * jnp.tanh(corr)                      # (1, 6)

    # Merged pose output: one (2, 6) store instead of two 6-wide masked stores.
    poses_ref[0] = jnp.concatenate([pose, refined], axis=0)     # (2, 6)


def diffposenet_forward(img1, img2, params):
    B, C, H, W = img1.shape
    kernel = functools.partial(_fused_kernel, C, H, W)
    const2 = lambda b: (0, 0)

    flow, poses = pl.pallas_call(
        kernel,
        out_shape=(
            jax.ShapeDtypeStruct((B, 2, H, W), jnp.float32),   # normal_flow
            jax.ShapeDtypeStruct((B, 2, 6), jnp.float32),      # [init_pose, refined_pose]
        ),
        grid=(B,),
        in_specs=[
            pl.BlockSpec((1, C, H, W), lambda b: (b, 0, 0, 0)),   # img1
            pl.BlockSpec((1, C, H, W), lambda b: (b, 0, 0, 0)),   # img2
            pl.BlockSpec(memory_space=pltpu.MemorySpace.SMEM),    # w_nflow (scalars)
            pl.BlockSpec((2 * C, 6), const2),                     # w_pose
            pl.BlockSpec((1, 6), const2),                         # b_pose
            pl.BlockSpec((2, 6), const2),                         # w_cheir
        ],
        out_specs=(
            pl.BlockSpec((1, 2, H, W), lambda b: (b, 0, 0, 0)),   # normal_flow
            pl.BlockSpec((1, 2, 6), lambda b: (b, 0, 0)),         # poses
        ),
        compiler_params=pltpu.CompilerParams(
            dimension_semantics=("parallel",)),
    )(img1, img2,
      params["w_nflow"], params["w_pose"], params["b_pose"], params["w_cheir"])

    init_pose = poses[:, 0, :]                 # (B, 6)
    refined_pose = poses[:, 1, :]              # (B, 6)
    # torch.no_grad() around nflownet -> stop_gradient on its output (forward-only).
    normal_flow = jax.lax.stop_gradient(flow)
    return refined_pose, init_pose, normal_flow


def init_params(key, C):
    k1, k2, k3, k4 = jax.random.split(key, 4)
    return {
        "w_nflow": 0.1 * jax.random.normal(k1, (2, 2 * C), jnp.float32),
        "w_pose": 0.1 * jax.random.normal(k2, (2 * C, 6), jnp.float32),
        "b_pose": 0.01 * jax.random.normal(k3, (1, 6), jnp.float32),
        "w_cheir": 0.1 * jax.random.normal(k4, (2, 6), jnp.float32),
    }


if __name__ == "__main__":
    B, C, H, W = 2, 4, 16, 16
    key = jax.random.PRNGKey(0)
    k1, k2 = jax.random.split(key)
    img1 = jax.random.normal(k1, (B, C, H, W), jnp.float32)
    img2 = jax.random.normal(k2, (B, C, H, W), jnp.float32)
    params = init_params(jax.random.PRNGKey(42), C)

    fwd = jax.jit(diffposenet_forward)
    refined_pose, init_pose, normal_flow = fwd(img1, img2, params)
    jax.block_until_ready((refined_pose, init_pose, normal_flow))

    assert refined_pose.shape == (B, 6)
    assert init_pose.shape == (B, 6)
    assert normal_flow.shape == (B, 2, H, W)
    print("KERNEL_OK")
</pallas_src>

<mosaic_0001>
module attributes {stable_mosaic.version = 11 : i64} {
  func.func @_fused_kernel(%arg0: i32, %arg1: memref<1x4x16x16xf32, #tpu.memory_space<vmem>>, %arg2: memref<1x4x16x16xf32, #tpu.memory_space<vmem>>, %arg3: memref<2x8xf32, #tpu.memory_space<smem>>, %arg4: memref<8x6xf32, #tpu.memory_space<vmem>>, %arg5: memref<1x6xf32, #tpu.memory_space<vmem>>, %arg6: memref<2x6xf32, #tpu.memory_space<vmem>>, %arg7: memref<1x2x16x16xf32, #tpu.memory_space<vmem>>, %arg8: memref<1x2x6xf32, #tpu.memory_space<vmem>>) attributes {dimension_semantics = [#tpu.dimension_semantics<parallel>], iteration_bounds = array<i64: 2>, scalar_prefetch = 0 : i64, scratch_operands = 0 : i64, tpu.core_type = #tpu.core_type<tc>, window_params = [{transform_indices = @transform_0, window_bounds = array<i64: 1, 4, 16, 16>}, {transform_indices = @transform_1, window_bounds = array<i64: 1, 4, 16, 16>}, {transform_indices = @transform_2, window_bounds = array<i64: 2, 8>}, {pipeline_mode = #tpu.pipeline_mode<synchronous>, transform_indices = @transform_3, window_bounds = array<i64: 8, 6>}, {pipeline_mode = #tpu.pipeline_mode<synchronous>, transform_indices = @transform_4, window_bounds = array<i64: 1, 6>}, {pipeline_mode = #tpu.pipeline_mode<synchronous>, transform_indices = @transform_5, window_bounds = array<i64: 2, 6>}, {transform_indices = @transform_6, window_bounds = array<i64: 1, 2, 16, 16>}, {transform_indices = @transform_7, window_bounds = array<i64: 1, 2, 6>}]} {
    %cst = arith.constant 0.000000e+00 : f32
    %0 = vector.broadcast %cst : f32 to vector<16x16xf32>
    %cst_0 = arith.constant 0.000000e+00 : f32
    %1 = vector.broadcast %cst_0 : f32 to vector<16x16xf32>
    %cst_1 = arith.constant 0.000000e+00 : f32
    %2 = vector.broadcast %cst_1 : f32 to vector<16x16xf32>
    %c0 = arith.constant 0 : index
    %c0_2 = arith.constant 0 : index
    %3 = vector.load %arg5[%c0, %c0_2] : memref<1x6xf32, #tpu.memory_space<vmem>>, vector<1x6xf32>
    %c0_3 = arith.constant 0 : index
    %c0_4 = arith.constant 0 : index
    %c0_5 = arith.constant 0 : index
    %c0_6 = arith.constant 0 : index
    %4 = vector.load %arg1[%c0_3, %c0_4, %c0_5, %c0_6] : memref<1x4x16x16xf32, #tpu.memory_space<vmem>>, vector<1x1x16x16xf32>
    %5 = vector.shape_cast %4 : vector<1x1x16x16xf32> to vector<16x16xf32>
    %c0_7 = arith.constant 0 : index
    %c0_8 = arith.constant 0 : index
    %c0_9 = arith.constant 0 : index
    %c0_10 = arith.constant 0 : index
    %6 = vector.load %arg2[%c0_7, %c0_8, %c0_9, %c0_10] : memref<1x4x16x16xf32, #tpu.memory_space<vmem>>, vector<1x1x16x16xf32>
    %7 = vector.shape_cast %6 : vector<1x1x16x16xf32> to vector<16x16xf32>
    %8 = arith.addf %0, %5 : vector<16x16xf32>
    %9 = arith.addf %8, %7 : vector<16x16xf32>
    %c0_11 = arith.constant 0 : index
    %c0_12 = arith.constant 0 : index
    %10 = memref.load %arg3[%c0_11, %c0_12] : memref<2x8xf32, #tpu.memory_space<smem>>
    %11 = vector.broadcast %10 : f32 to vector<16x16xf32>
    %12 = arith.mulf %11, %5 : vector<16x16xf32>
    %13 = arith.addf %1, %12 : vector<16x16xf32>
    %c0_13 = arith.constant 0 : index
    %c4 = arith.constant 4 : index
    %14 = memref.load %arg3[%c0_13, %c4] : memref<2x8xf32, #tpu.memory_space<smem>>
    %15 = vector.broadcast %14 : f32 to vector<16x16xf32>
    %16 = arith.mulf %15, %7 : vector<16x16xf32>
    %17 = arith.addf %13, %16 : vector<16x16xf32>
    %c1 = arith.constant 1 : index
    %c0_14 = arith.constant 0 : index
    %18 = memref.load %arg3[%c1, %c0_14] : memref<2x8xf32, #tpu.memory_space<smem>>
    %19 = vector.broadcast %18 : f32 to vector<16x16xf32>
    %20 = arith.mulf %19, %5 : vector<16x16xf32>
    %21 = arith.addf %2, %20 : vector<16x16xf32>
    %c1_15 = arith.constant 1 : index
    %c4_16 = arith.constant 4 : index
    %22 = memref.load %arg3[%c1_15, %c4_16] : memref<2x8xf32, #tpu.memory_space<smem>>
    %23 = vector.broadcast %22 : f32 to vector<16x16xf32>
    %24 = arith.mulf %23, %7 : vector<16x16xf32>
    %25 = arith.addf %21, %24 : vector<16x16xf32>
    %cst_17 = arith.constant dense<0.000000e+00> : vector<16xf32>
    %26 = vector.multi_reduction <add>, %5, %cst_17 [1] : vector<16x16xf32> to vector<16xf32>
    %27 = vector.shape_cast %26 : vector<16xf32> to vector<16x1xf32>
    %cst_18 = arith.constant dense<0.000000e+00> : vector<1xf32>
    %28 = vector.multi_reduction <add>, %27, %cst_18 [0] : vector<16x1xf32> to vector<1xf32>
    %29 = vector.shape_cast %28 : vector<1xf32> to vector<1x1xf32>
    %cst_19 = arith.constant 3.906250e-03 : f32
    %30 = vector.broadcast %cst_19 : f32 to vector<1x1xf32>
    %31 = arith.mulf %29, %30 : vector<1x1xf32>
    %cst_20 = arith.constant dense<0.000000e+00> : vector<16xf32>
    %32 = vector.multi_reduction <add>, %7, %cst_20 [1] : vector<16x16xf32> to vector<16xf32>
    %33 = vector.shape_cast %32 : vector<16xf32> to vector<16x1xf32>
    %cst_21 = arith.constant dense<0.000000e+00> : vector<1xf32>
    %34 = vector.multi_reduction <add>, %33, %cst_21 [0] : vector<16x1xf32> to vector<1xf32>
    %35 = vector.shape_cast %34 : vector<1xf32> to vector<1x1xf32>
    %cst_22 = arith.constant 3.906250e-03 : f32
    %36 = vector.broadcast %cst_22 : f32 to vector<1x1xf32>
    %37 = arith.mulf %35, %36 : vector<1x1xf32>
    %c0_23 = arith.constant 0 : index
    %c0_24 = arith.constant 0 : index
    %38 = vector.load %arg4[%c0_23, %c0_24] : memref<8x6xf32, #tpu.memory_space<vmem>>, vector<1x6xf32>
    %39 = vector.broadcast %31 : vector<1x1xf32> to vector<1x6xf32>
    %40 = arith.mulf %39, %38 : vector<1x6xf32>
    %41 = arith.addf %3, %40 : vector<1x6xf32>
    %c4_25 = arith.constant 4 : index
    %c0_26 = arith.constant 0 : index
    %42 = vector.load %arg4[%c4_25, %c0_26] : memref<8x6xf32, #tpu.memory_space<vmem>>, vector<1x6xf32>
    %43 = vector.broadcast %37 : vector<1x1xf32> to vector<1x6xf32>
    %44 = arith.mulf %43, %42 : vector<1x6xf32>
    %45 = arith.addf %41, %44 : vector<1x6xf32>
    %c0_27 = arith.constant 0 : index
    %c1_28 = arith.constant 1 : index
    %c0_29 = arith.constant 0 : index
    %c0_30 = arith.constant 0 : index
    %46 = vector.load %arg1[%c0_27, %c1_28, %c0_29, %c0_30] : memref<1x4x16x16xf32, #tpu.memory_space<vmem>>, vector<1x1x16x16xf32>
    %47 = vector.shape_cast %46 : vector<1x1x16x16xf32> to vector<16x16xf32>
    %c0_31 = arith.constant 0 : index
    %c1_32 = arith.constant 1 : index
    %c0_33 = arith.constant 0 : index
    %c0_34 = arith.constant 0 : index
    %48 = vector.load %arg2[%c0_31, %c1_32, %c0_33, %c0_34] : memref<1x4x16x16xf32, #tpu.memory_space<vmem>>, vector<1x1x16x16xf32>
    %49 = vector.shape_cast %48 : vector<1x1x16x16xf32> to vector<16x16xf32>
    %50 = arith.addf %9, %47 : vector<16x16xf32>
    %51 = arith.addf %50, %49 : vector<16x16xf32>
    %c0_35 = arith.constant 0 : index
    %c1_36 = arith.constant 1 : index
    %52 = memref.load %arg3[%c0_35, %c1_36] : memref<2x8xf32, #tpu.memory_space<smem>>
    %53 = vector.broadcast %52 : f32 to vector<16x16xf32>
    %54 = arith.mulf %53, %47 : vector<16x16xf32>
    %55 = arith.addf %17, %54 : vector<16x16xf32>
    %c0_37 = arith.constant 0 : index
    %c5 = arith.constant 5 : index
    %56 = memref.load %arg3[%c0_37, %c5] : memref<2x8xf32, #tpu.memory_space<smem>>
    %57 = vector.broadcast %56 : f32 to vector<16x16xf32>
    %58 = arith.mulf %57, %49 : vector<16x16xf32>
    %59 = arith.addf %55, %58 : vector<16x16xf32>
    %c1_38 = arith.constant 1 : index
    %c1_39 = arith.constant 1 : index
    %60 = memref.load %arg3[%c1_38, %c1_39] : memref<2x8xf32, #tpu.memory_space<smem>>
    %61 = vector.broadcast %60 : f32 to vector<16x16xf32>
    %62 = arith.mulf %61, %47 : vector<16x16xf32>
    %63 = arith.addf %25, %62 : vector<16x16xf32>
    %c1_40 = arith.constant 1 : index
    %c5_41 = arith.constant 5 : index
    %64 = memref.load %arg3[%c1_40, %c5_41] : memref<2x8xf32, #tpu.memory_space<smem>>
    %65 = vector.broadcast %64 : f32 to vector<16x16xf32>
    %66 = arith.mulf %65, %49 : vector<16x16xf32>
    %67 = arith.addf %63, %66 : vector<16x16xf32>
    %cst_42 = arith.constant dense<0.000000e+00> : vector<16xf32>
    %68 = vector.multi_reduction <add>, %47, %cst_42 [1] : vector<16x16xf32> to vector<16xf32>
    %69 = vector.shape_cast %68 : vector<16xf32> to vector<16x1xf32>
    %cst_43 = arith.constant dense<0.000000e+00> : vector<1xf32>
    %70 = vector.multi_reduction <add>, %69, %cst_43 [0] : vector<16x1xf32> to vector<1xf32>
    %71 = vector.shape_cast %70 : vector<1xf32> to vector<1x1xf32>
    %cst_44 = arith.constant 3.906250e-03 : f32
    %72 = vector.broadcast %cst_44 : f32 to vector<1x1xf32>
    %73 = arith.mulf %71, %72 : vector<1x1xf32>
    %cst_45 = arith.constant dense<0.000000e+00> : vector<16xf32>
    %74 = vector.multi_reduction <add>, %49, %cst_45 [1] : vector<16x16xf32> to vector<16xf32>
    %75 = vector.shape_cast %74 : vector<16xf32> to vector<16x1xf32>
    %cst_46 = arith.constant dense<0.000000e+00> : vector<1xf32>
    %76 = vector.multi_reduction <add>, %75, %cst_46 [0] : vector<16x1xf32> to vector<1xf32>
    %77 = vector.shape_cast %76 : vector<1xf32> to vector<1x1xf32>
    %cst_47 = arith.constant 3.906250e-03 : f32
    %78 = vector.broadcast %cst_47 : f32 to vector<1x1xf32>
    %79 = arith.mulf %77, %78 : vector<1x1xf32>
    %c1_48 = arith.constant 1 : index
    %c0_49 = arith.constant 0 : index
    %80 = vector.load %arg4[%c1_48, %c0_49] : memref<8x6xf32, #tpu.memory_space<vmem>>, vector<1x6xf32>
    %81 = vector.broadcast %73 : vector<1x1xf32> to vector<1x6xf32>
    %82 = arith.mulf %81, %80 : vector<1x6xf32>
    %83 = arith.addf %45, %82 : vector<1x6xf32>
    %c5_50 = arith.constant 5 : index
    %c0_51 = arith.constant 0 : index
    %84 = vector.load %arg4[%c5_50, %c0_51] : memref<8x6xf32, #tpu.memory_space<vmem>>, vector<1x6xf32>
    %85 = vector.broadcast %79 : vector<1x1xf32> to vector<1x6xf32>
    %86 = arith.mulf %85, %84 : vector<1x6xf32>
    %87 = arith.addf %83, %86 : vector<1x6xf32>
    %c0_52 = arith.constant 0 : index
    %c2 = arith.constant 2 : index
    %c0_53 = arith.constant 0 : index
    %c0_54 = arith.constant 0 : index
    %88 = vector.load %arg1[%c0_52, %c2, %c0_53, %c0_54] : memref<1x4x16x16xf32, #tpu.memory_space<vmem>>, vector<1x1x16x16xf32>
    %89 = vector.shape_cast %88 : vector<1x1x16x16xf32> to vector<16x16xf32>
    %c0_55 = arith.constant 0 : index
    %c2_56 = arith.constant 2 : index
    %c0_57 = arith.constant 0 : index
    %c0_58 = arith.constant 0 : index
    %90 = vector.load %arg2[%c0_55, %c2_56, %c0_57, %c0_58] : memref<1x4x16x16xf32, #tpu.memory_space<vmem>>, vector<1x1x16x16xf32>
    %91 = vector.shape_cast %90 : vector<1x1x16x16xf32> to vector<16x16xf32>
    %92 = arith.addf %51, %89 : vector<16x16xf32>
    %93 = arith.addf %92, %91 : vector<16x16xf32>
    %c0_59 = arith.constant 0 : index
    %c2_60 = arith.constant 2 : index
    %94 = memref.load %arg3[%c0_59, %c2_60] : memref<2x8xf32, #tpu.memory_space<smem>>
    %95 = vector.broadcast %94 : f32 to vector<16x16xf32>
    %96 = arith.mulf %95, %89 : vector<16x16xf32>
    %97 = arith.addf %59, %96 : vector<16x16xf32>
    %c0_61 = arith.constant 0 : index
    %c6 = arith.constant 6 : index
    %98 = memref.load %arg3[%c0_61, %c6] : memref<2x8xf32, #tpu.memory_space<smem>>
    %99 = vector.broadcast %98 : f32 to vector<16x16xf32>
    %100 = arith.mulf %99, %91 : vector<16x16xf32>
    %101 = arith.addf %97, %100 : vector<16x16xf32>
    %c1_62 = arith.constant 1 : index
    %c2_63 = arith.constant 2 : index
    %102 = memref.load %arg3[%c1_62, %c2_63] : memref<2x8xf32, #tpu.memory_space<smem>>
    %103 = vector.broadcast %102 : f32 to vector<16x16xf32>
    %104 = arith.mulf %103, %89 : vector<16x16xf32>
    %105 = arith.addf %67, %104 : vector<16x16xf32>
    %c1_64 = arith.constant 1 : index
    %c6_65 = arith.constant 6 : index
    %106 = memref.load %arg3[%c1_64, %c6_65] : memref<2x8xf32, #tpu.memory_space<smem>>
    %107 = vector.broadcast %106 : f32 to vector<16x16xf32>
    %108 = arith.mulf %107, %91 : vector<16x16xf32>
    %109 = arith.addf %105, %108 : vector<16x16xf32>
    %cst_66 = arith.constant dense<0.000000e+00> : vector<16xf32>
    %110 = vector.multi_reduction <add>, %89, %cst_66 [1] : vector<16x16xf32> to vector<16xf32>
    %111 = vector.shape_cast %110 : vector<16xf32> to vector<16x1xf32>
    %cst_67 = arith.constant dense<0.000000e+00> : vector<1xf32>
    %112 = vector.multi_reduction <add>, %111, %cst_67 [0] : vector<16x1xf32> to vector<1xf32>
    %113 = vector.shape_cast %112 : vector<1xf32> to vector<1x1xf32>
    %cst_68 = arith.constant 3.906250e-03 : f32
    %114 = vector.broadcast %cst_68 : f32 to vector<1x1xf32>
    %115 = arith.mulf %113, %114 : vector<1x1xf32>
    %cst_69 = arith.constant dense<0.000000e+00> : vector<16xf32>
    %116 = vector.multi_reduction <add>, %91, %cst_69 [1] : vector<16x16xf32> to vector<16xf32>
    %117 = vector.shape_cast %116 : vector<16xf32> to vector<16x1xf32>
    %cst_70 = arith.constant dense<0.000000e+00> : vector<1xf32>
    %118 = vector.multi_reduction <add>, %117, %cst_70 [0] : vector<16x1xf32> to vector<1xf32>
    %119 = vector.shape_cast %118 : vector<1xf32> to vector<1x1xf32>
    %cst_71 = arith.constant 3.906250e-03 : f32
    %120 = vector.broadcast %cst_71 : f32 to vector<1x1xf32>
    %121 = arith.mulf %119, %120 : vector<1x1xf32>
    %c2_72 = arith.constant 2 : index
    %c0_73 = arith.constant 0 : index
    %122 = vector.load %arg4[%c2_72, %c0_73] : memref<8x6xf32, #tpu.memory_space<vmem>>, vector<1x6xf32>
    %123 = vector.broadcast %115 : vector<1x1xf32> to vector<1x6xf32>
    %124 = arith.mulf %123, %122 : vector<1x6xf32>
    %125 = arith.addf %87, %124 : vector<1x6xf32>
    %c6_74 = arith.constant 6 : index
    %c0_75 = arith.constant 0 : index
    %126 = vector.load %arg4[%c6_74, %c0_75] : memref<8x6xf32, #tpu.memory_space<vmem>>, vector<1x6xf32>
    %127 = vector.broadcast %121 : vector<1x1xf32> to vector<1x6xf32>
    %128 = arith.mulf %127, %126 : vector<1x6xf32>
    %129 = arith.addf %125, %128 : vector<1x6xf32>
    %c0_76 = arith.constant 0 : index
    %c3 = arith.constant 3 : index
    %c0_77 = arith.constant 0 : index
    %c0_78 = arith.constant 0 : index
    %130 = vector.load %arg1[%c0_76, %c3, %c0_77, %c0_78] : memref<1x4x16x16xf32, #tpu.memory_space<vmem>>, vector<1x1x16x16xf32>
    %131 = vector.shape_cast %130 : vector<1x1x16x16xf32> to vector<16x16xf32>
    %c0_79 = arith.constant 0 : index
    %c3_80 = arith.constant 3 : index
    %c0_81 = arith.constant 0 : index
    %c0_82 = arith.constant 0 : index
    %132 = vector.load %arg2[%c0_79, %c3_80, %c0_81, %c0_82] : memref<1x4x16x16xf32, #tpu.memory_space<vmem>>, vector<1x1x16x16xf32>
    %133 = vector.shape_cast %132 : vector<1x1x16x16xf32> to vector<16x16xf32>
    %134 = arith.addf %93, %131 : vector<16x16xf32>
    %135 = arith.addf %134, %133 : vector<16x16xf32>
    %c0_83 = arith.constant 0 : index
    %c3_84 = arith.constant 3 : index
    %136 = memref.load %arg3[%c0_83, %c3_84] : memref<2x8xf32, #tpu.memory_space<smem>>
    %137 = vector.broadcast %136 : f32 to vector<16x16xf32>
    %138 = arith.mulf %137, %131 : vector<16x16xf32>
    %139 = arith.addf %101, %138 : vector<16x16xf32>
    %c0_85 = arith.constant 0 : index
    %c7 = arith.constant 7 : index
    %140 = memref.load %arg3[%c0_85, %c7] : memref<2x8xf32, #tpu.memory_space<smem>>
    %141 = vector.broadcast %140 : f32 to vector<16x16xf32>
    %142 = arith.mulf %141, %133 : vector<16x16xf32>
    %143 = arith.addf %139, %142 : vector<16x16xf32>
    %c1_86 = arith.constant 1 : index
    %c3_87 = arith.constant 3 : index
    %144 = memref.load %arg3[%c1_86, %c3_87] : memref<2x8xf32, #tpu.memory_space<smem>>
    %145 = vector.broadcast %144 : f32 to vector<16x16xf32>
    %146 = arith.mulf %145, %131 : vector<16x16xf32>
    %147 = arith.addf %109, %146 : vector<16x16xf32>
    %c1_88 = arith.constant 1 : index
    %c7_89 = arith.constant 7 : index
    %148 = memref.load %arg3[%c1_88, %c7_89] : memref<2x8xf32, #tpu.memory_space<smem>>
    %149 = vector.broadcast %148 : f32 to vector<16x16xf32>
    %150 = arith.mulf %149, %133 : vector<16x16xf32>
    %151 = arith.addf %147, %150 : vector<16x16xf32>
    %cst_90 = arith.constant dense<0.000000e+00> : vector<16xf32>
    %152 = vector.multi_reduction <add>, %131, %cst_90 [1] : vector<16x16xf32> to vector<16xf32>
    %153 = vector.shape_cast %152 : vector<16xf32> to vector<16x1xf32>
    %cst_91 = arith.constant dense<0.000000e+00> : vector<1xf32>
    %154 = vector.multi_reduction <add>, %153, %cst_91 [0] : vector<16x1xf32> to vector<1xf32>
    %155 = vector.shape_cast %154 : vector<1xf32> to vector<1x1xf32>
    %cst_92 = arith.constant 3.906250e-03 : f32
    %156 = vector.broadcast %cst_92 : f32 to vector<1x1xf32>
    %157 = arith.mulf %155, %156 : vector<1x1xf32>
    %cst_93 = arith.constant dense<0.000000e+00> : vector<16xf32>
    %158 = vector.multi_reduction <add>, %133, %cst_93 [1] : vector<16x16xf32> to vector<16xf32>
    %159 = vector.shape_cast %158 : vector<16xf32> to vector<16x1xf32>
    %cst_94 = arith.constant dense<0.000000e+00> : vector<1xf32>
    %160 = vector.multi_reduction <add>, %159, %cst_94 [0] : vector<16x1xf32> to vector<1xf32>
    %161 = vector.shape_cast %160 : vector<1xf32> to vector<1x1xf32>
    %cst_95 = arith.constant 3.906250e-03 : f32
    %162 = vector.broadcast %cst_95 : f32 to vector<1x1xf32>
    %163 = arith.mulf %161, %162 : vector<1x1xf32>
    %c3_96 = arith.constant 3 : index
    %c0_97 = arith.constant 0 : index
    %164 = vector.load %arg4[%c3_96, %c0_97] : memref<8x6xf32, #tpu.memory_space<vmem>>, vector<1x6xf32>
    %165 = vector.broadcast %157 : vector<1x1xf32> to vector<1x6xf32>
    %166 = arith.mulf %165, %164 : vector<1x6xf32>
    %167 = arith.addf %129, %166 : vector<1x6xf32>
    %c7_98 = arith.constant 7 : index
    %c0_99 = arith.constant 0 : index
    %168 = vector.load %arg4[%c7_98, %c0_99] : memref<8x6xf32, #tpu.memory_space<vmem>>, vector<1x6xf32>
    %169 = vector.broadcast %163 : vector<1x1xf32> to vector<1x6xf32>
    %170 = arith.mulf %169, %168 : vector<1x6xf32>
    %171 = arith.addf %167, %170 : vector<1x6xf32>
    %cst_100 = arith.constant 1.250000e-01 : f32
    %172 = vector.broadcast %cst_100 : f32 to vector<16x16xf32>
    %173 = arith.mulf %135, %172 : vector<16x16xf32>
    %174 = math.tanh %143 : vector<16x16xf32>
    %175 = math.tanh %151 : vector<16x16xf32>
    %c0_101 = arith.constant 0 : index
    %c0_102 = arith.constant 0 : index
    %c0_103 = arith.constant 0 : index
    %c0_104 = arith.constant 0 : index
    %176 = vector.load %arg7[%c0_101, %c0_102, %c0_103, %c0_104] : memref<1x2x16x16xf32, #tpu.memory_space<vmem>>, vector<1x1x16x16xf32>
    %177 = vector.shape_cast %176 : vector<1x1x16x16xf32> to vector<16x16xf32>
    %178 = vector.shape_cast %174 : vector<16x16xf32> to vector<1x1x16x16xf32>
    tpu.vector_store %arg7[%c0_101, %c0_102, %c0_103, %c0_104], %178 {strides = array<i32>} : memref<1x2x16x16xf32, #tpu.memory_space<vmem>>, vector<1x1x16x16xf32>,
    %c0_105 = arith.constant 0 : index
    %c1_106 = arith.constant 1 : index
    %c0_107 = arith.constant 0 : index
    %c0_108 = arith.constant 0 : index
    %179 = vector.load %arg7[%c0_105, %c1_106, %c0_107, %c0_108] : memref<1x2x16x16xf32, #tpu.memory_space<vmem>>, vector<1x1x16x16xf32>
    %180 = vector.shape_cast %179 : vector<1x1x16x16xf32> to vector<16x16xf32>
    %181 = vector.shape_cast %175 : vector<16x16xf32> to vector<1x1x16x16xf32>
    tpu.vector_store %arg7[%c0_105, %c1_106, %c0_107, %c0_108], %181 {strides = array<i32>} : memref<1x2x16x16xf32, #tpu.memory_space<vmem>>, vector<1x1x16x16xf32>,
    %cst_109 = arith.constant 0.000000e+00 : f32
    %182 = vector.broadcast %cst_109 : f32 to vector<16x1xf32>
    %183 = vector.extract_strided_slice %173 {offsets = [0, 0], sizes = [16, 15], strides = [1, 1]} : vector<16x16xf32> to vector<16x15xf32>
    %184 = tpu.concatenate %182, %183 in 1 : vector<16x1xf32>, vector<16x15xf32> -> vector<16x16xf32>
    %cst_110 = arith.constant 0.000000e+00 : f32
    %185 = vector.broadcast %cst_110 : f32 to vector<16x1xf32>
    %186 = vector.extract_strided_slice %173 {offsets = [0, 1], sizes = [16, 15], strides = [1, 1]} : vector<16x16xf32> to vector<16x15xf32>
    %187 = tpu.concatenate %186, %185 in 1 : vector<16x15xf32>, vector<16x1xf32> -> vector<16x16xf32>
    %188 = arith.subf %187, %184 : vector<16x16xf32>
    %cst_111 = arith.constant 2.000000e+00 : f32
    %189 = vector.broadcast %cst_111 : f32 to vector<16x16xf32>
    %190 = arith.mulf %189, %173 : vector<16x16xf32>
    %191 = arith.addf %184, %190 : vector<16x16xf32>
    %192 = arith.addf %191, %187 : vector<16x16xf32>
    %cst_112 = arith.constant 0.000000e+00 : f32
    %193 = vector.broadcast %cst_112 : f32 to vector<1x16xf32>
    %194 = vector.extract_strided_slice %188 {offsets = [0, 0], sizes = [15, 16], strides = [1, 1]} : vector<16x16xf32> to vector<15x16xf32>
    %195 = tpu.concatenate %193, %194 in 0 : vector<1x16xf32>, vector<15x16xf32> -> vector<16x16xf32>
    %cst_113 = arith.constant 2.000000e+00 : f32
    %196 = vector.broadcast %cst_113 : f32 to vector<16x16xf32>
    %197 = arith.mulf %196, %188 : vector<16x16xf32>
    %198 = arith.addf %195, %197 : vector<16x16xf32>
    %cst_114 = arith.constant 0.000000e+00 : f32
    %199 = vector.broadcast %cst_114 : f32 to vector<1x16xf32>
    %200 = vector.extract_strided_slice %188 {offsets = [1, 0], sizes = [15, 16], strides = [1, 1]} : vector<16x16xf32> to vector<15x16xf32>
    %201 = tpu.concatenate %200, %199 in 0 : vector<15x16xf32>, vector<1x16xf32> -> vector<16x16xf32>
    %202 = arith.addf %198, %201 : vector<16x16xf32>
    %cst_115 = arith.constant 0.000000e+00 : f32
    %203 = vector.broadcast %cst_115 : f32 to vector<1x16xf32>
    %204 = vector.extract_strided_slice %192 {offsets = [1, 0], sizes = [15, 16], strides = [1, 1]} : vector<16x16xf32> to vector<15x16xf32>
    %205 = tpu.concatenate %204, %203 in 0 : vector<15x16xf32>, vector<1x16xf32> -> vector<16x16xf32>
    %cst_116 = arith.constant 0.000000e+00 : f32
    %206 = vector.broadcast %cst_116 : f32 to vector<1x16xf32>
    %207 = vector.extract_strided_slice %192 {offsets = [0, 0], sizes = [15, 16], strides = [1, 1]} : vector<16x16xf32> to vector<15x16xf32>
    %208 = tpu.concatenate %206, %207 in 0 : vector<1x16xf32>, vector<15x16xf32> -> vector<16x16xf32>
    %209 = arith.subf %205, %208 : vector<16x16xf32>
    %210 = arith.mulf %174, %202 : vector<16x16xf32>
    %cst_117 = arith.constant dense<0.000000e+00> : vector<16xf32>
    %211 = vector.multi_reduction <add>, %210, %cst_117 [1] : vector<16x16xf32> to vector<16xf32>
    %212 = vector.shape_cast %211 : vector<16xf32> to vector<16x1xf32>
    %cst_118 = arith.constant dense<0.000000e+00> : vector<1xf32>
    %213 = vector.multi_reduction <add>, %212, %cst_118 [0] : vector<16x1xf32> to vector<1xf32>
    %214 = vector.shape_cast %213 : vector<1xf32> to vector<1x1xf32>
    %cst_119 = arith.constant 3.906250e-03 : f32
    %215 = vector.broadcast %cst_119 : f32 to vector<1x1xf32>
    %216 = arith.mulf %214, %215 : vector<1x1xf32>
    %217 = arith.mulf %175, %209 : vector<16x16xf32>
    %cst_120 = arith.constant dense<0.000000e+00> : vector<16xf32>
    %218 = vector.multi_reduction <add>, %217, %cst_120 [1] : vector<16x16xf32> to vector<16xf32>
    %219 = vector.shape_cast %218 : vector<16xf32> to vector<16x1xf32>
    %cst_121 = arith.constant dense<0.000000e+00> : vector<1xf32>
    %220 = vector.multi_reduction <add>, %219, %cst_121 [0] : vector<16x1xf32> to vector<1xf32>
    %221 = vector.shape_cast %220 : vector<1xf32> to vector<1x1xf32>
    %cst_122 = arith.constant 3.906250e-03 : f32
    %222 = vector.broadcast %cst_122 : f32 to vector<1x1xf32>
    %223 = arith.mulf %221, %222 : vector<1x1xf32>
    %c0_123 = arith.constant 0 : index
    %c0_124 = arith.constant 0 : index
    %224 = vector.load %arg6[%c0_123, %c0_124] : memref<2x6xf32, #tpu.memory_space<vmem>>, vector<1x6xf32>
    %225 = vector.broadcast %216 : vector<1x1xf32> to vector<1x6xf32>
    %226 = arith.mulf %225, %224 : vector<1x6xf32>
    %c1_125 = arith.constant 1 : index
    %c0_126 = arith.constant 0 : index
    %227 = vector.load %arg6[%c1_125, %c0_126] : memref<2x6xf32, #tpu.memory_space<vmem>>, vector<1x6xf32>
    %228 = vector.broadcast %223 : vector<1x1xf32> to vector<1x6xf32>
    %229 = arith.mulf %228, %227 : vector<1x6xf32>
    %230 = arith.addf %226, %229 : vector<1x6xf32>
    %231 = math.tanh %230 : vector<1x6xf32>
    %cst_127 = arith.constant 0.00999999977 : f32
    %232 = vector.broadcast %cst_127 : f32 to vector<1x6xf32>
    %233 = arith.mulf %232, %231 : vector<1x6xf32>
    %234 = arith.addf %171, %233 : vector<1x6xf32>
    %235 = tpu.concatenate %171, %234 in 0 : vector<1x6xf32>, vector<1x6xf32> -> vector<2x6xf32>
    %c0_128 = arith.constant 0 : index
    %c0_129 = arith.constant 0 : index
    %c0_130 = arith.constant 0 : index
    %236 = vector.load %arg8[%c0_128, %c0_129, %c0_130] : memref<1x2x6xf32, #tpu.memory_space<vmem>>, vector<1x2x6xf32>
    %237 = vector.shape_cast %236 : vector<1x2x6xf32> to vector<2x6xf32>
    %238 = vector.shape_cast %235 : vector<2x6xf32> to vector<1x2x6xf32>
    tpu.vector_store %arg8[%c0_128, %c0_129, %c0_130], %238 {strides = array<i32>} : memref<1x2x6xf32, #tpu.memory_space<vmem>>, vector<1x2x6xf32>,
    return
  }
  func.func @transform_0(%arg0: i32) -> (i32, i32, i32, i32) {
    %c0_i32 = arith.constant 0 : i32
    %c0_i32_0 = arith.constant 0 : i32
    %c0_i32_1 = arith.constant 0 : i32
    %c0_i32_2 = arith.constant 0 : i32
    return %arg0, %c0_i32, %c0_i32_0, %c0_i32_1 : i32, i32, i32, i32
  }
  func.func @transform_1(%arg0: i32) -> (i32, i32, i32, i32) {
    %c0_i32 = arith.constant 0 : i32
    %c0_i32_0 = arith.constant 0 : i32
    %c0_i32_1 = arith.constant 0 : i32
    %c0_i32_2 = arith.constant 0 : i32
    return %arg0, %c0_i32, %c0_i32_0, %c0_i32_1 : i32, i32, i32, i32
  }
  func.func @transform_2(%arg0: i32) -> (i32, i32) {
    %c0_i32 = arith.constant 0 : i32
    %c0_i32_0 = arith.constant 0 : i32
    %c0_i32_1 = arith.constant 0 : i32
    return %c0_i32, %c0_i32_0 : i32, i32
  }
  func.func @transform_3(%arg0: i32) -> (i32, i32) {
    %c0_i32 = arith.constant 0 : i32
    %c0_i32_0 = arith.constant 0 : i32
    %c0_i32_1 = arith.constant 0 : i32
    return %c0_i32, %c0_i32_0 : i32, i32
  }
  func.func @transform_4(%arg0: i32) -> (i32, i32) {
    %c0_i32 = arith.constant 0 : i32
    %c0_i32_0 = arith.constant 0 : i32
    %c0_i32_1 = arith.constant 0 : i32
    return %c0_i32, %c0_i32_0 : i32, i32
  }
  func.func @transform_5(%arg0: i32) -> (i32, i32) {
    %c0_i32 = arith.constant 0 : i32
    %c0_i32_0 = arith.constant 0 : i32
    %c0_i32_1 = arith.constant 0 : i32
    return %c0_i32, %c0_i32_0 : i32, i32
  }
  func.func @transform_6(%arg0: i32) -> (i32, i32, i32, i32) {
    %c0_i32 = arith.constant 0 : i32
    %c0_i32_0 = arith.constant 0 : i32
    %c0_i32_1 = arith.constant 0 : i32
    %c0_i32_2 = arith.constant 0 : i32
    return %arg0, %c0_i32, %c0_i32_0, %c0_i32_1 : i32, i32, i32, i32
  }
  func.func @transform_7(%arg0: i32) -> (i32, i32, i32) {
    %c0_i32 = arith.constant 0 : i32
    %c0_i32_0 = arith.constant 0 : i32
    %c0_i32_1 = arith.constant 0 : i32
    return %arg0, %c0_i32, %c0_i32_0 : i32, i32, i32
  }
}

</mosaic_0001>

<llo_original>
// kernel: diffposenet_forward.1
$region0: #{diffposenet_forward.1}
  #allocation0 [shape = 'u32[]', space=smem, size = 0x4, offset = 0x4, fixed_abs, tag = 'smem constant byte address 0x4 - core index']
  #allocation1 [shape = 'u32[144,128]{1,0:T(1,128)}', space=vmem, size = 0x12000, scoped, tag = 'internal scratch']
  %s0 = inlined_call_operand.hbm [shape: f32[2,4,16,16], index: 0, kind: input, shape index: {}]
  %s1 = inlined_call_operand.hbm [shape: f32[2,4,16,16], index: 1, kind: input, shape index: {}]
  %s2 = inlined_call_operand.vmem [shape: f32[2,8], index: 2, kind: input, shape index: {}]
  %s3 = inlined_call_operand.vmem [shape: f32[8,6], index: 3, kind: input, shape index: {}]
  %s4 = inlined_call_operand.vmem [shape: f32[1,6], index: 4, kind: input, shape index: {}]
  %s5 = inlined_call_operand.vmem [shape: f32[2,6], index: 5, kind: input, shape index: {}]
  %s6 = inlined_call_operand.hbm [shape: f32[2,2,16,16], index: 6, kind: output, shape index: {0}]
  %s7 = inlined_call_operand.vmem [shape: f32[2,2,6], index: 7, kind: output, shape index: {1}]
  %8 = xla_tuple %s6, %s7
  %s9 = sld [smem:[#allocation0]]
  $region77: #{diffposenet_forward.1} parent=0
    _
  %s11 = ssub.s32 1, %s9
  %s12 = scalar_select 0, %s11, %s9
  $region1: #{diffposenet_forward.1} parent=0
    #allocation2 [shape = 'u8[65536]{0}', space=vmem, size = 0x10000, scoped, tag = 'input window, operand 0']
    #allocation3 [shape = 's32[2]{0}', space=sflag, size = 0x8, scoped, tag = 'scoped memory for diffposenet_forward.1']
    #allocation4 [shape = 's32[2]{0}', space=sflag, size = 0x8, scoped, tag = 'scoped memory for diffposenet_forward.1']
    #allocation5 [shape = 's32[2]{0}', space=sflag, size = 0x8, scoped, tag = 'scoped memory for diffposenet_forward.1']
    #allocation6 [shape = 'u8[65536]{0}', space=vmem, size = 0x10000, scoped, tag = 'input window, operand 1']
    #allocation7 [shape = 's32[2]{0}', space=sflag, size = 0x8, scoped, tag = 'scoped memory for diffposenet_forward.1']
    #allocation8 [shape = 'u8[1024]{0}', space=smem, size = 0x400, scoped, tag = 'input window, operand 2, single buffered']
    #allocation9 [shape = 'u8[32768]{0}', space=vmem, size = 0x8000, scoped, tag = 'output window, operand 0']
    %13 = vsyncpa [#allocation3], 0
    %s14 = scalar_lea.sflag [#allocation3], 1
    %15 = vsyncpa %s14, 0
    %16 = vsyncpa [#allocation7], 0
    %s17 = scalar_lea.sflag [#allocation7], 1
    %18 = vsyncpa %s17, 0
    %19 = vsyncpa [#allocation5], 0
    %20 = vsyncpa [#allocation4], 0
    %s21 = scalar_lea.sflag [#allocation4], 1
    %22 = vsyncpa %s21, 0
    loop: start=0, step=1, limit=4
    $region2: #{diffposenet_forward.1} parent=1 // loop_pre_header
      _
    $region3: #{diffposenet_forward.1} parent=1 // loop_header
      %s24 = sphi 0, %s28
      %p25 = scmp.ge.s32.totalorder %s24, 4
      %s34 = sphi 0, %s36
      %s37 = sphi 0, %s34
      %s38 = sphi 0, %s37
      %s54 = sphi 0, %s38
      %s60 = sphi 0, %s62
      %s63 = sphi 0, %s60
      %s64 = sphi 0, %s63
      %s80 = sphi 0, %s64
      %s84 = sphi 0, %s84
      %s86 = sphi 0, %s84
      %s87 = sphi 0, %s86
      %s101 = sphi 0, %s87
      %s105 = sphi 0, %s105
      %s107 = sphi 0, %s105
      %s108 = sphi 0, %s107
      %s122 = sphi 0, %s108
      %s126 = sphi 0, %s126
      %s128 = sphi 0, %s126
      %s129 = sphi 0, %s128
      %s143 = sphi 0, %s129
      %s147 = sphi 0, %s147
      %s149 = sphi 0, %s147
      %s150 = sphi 0, %s149
      %s164 = sphi 0, %s150
      %s170 = sphi 0, %s172
      %s173 = sphi 0, %s170
      %s174 = sphi 0, %s173
      %s190 = sphi 0, %s174
      %s196 = sphi 0, %s198
      %s199 = sphi 0, %s196
      %s200 = sphi 0, %s199
      %s216 = sphi 0, %s200
    $region4: #{diffposenet_forward.1} parent=1 // loop_header_branch
      %27 = sbr.rel (%p25) target = $region8
    $region5: #{diffposenet_forward.1} parent=1 // loop_body
      %s29 = ssub.s32 %s24, 1
      %s30 = ssub.s32 %s24, 2
      %s31 = sadd.s32 %s24, 1
      %s32 = ssub.s32 %s24, %s31
      %p33 = scmp.eq.s32.totalorder %s32, 0
      %s35 = sadd.s32 %s34, 1
      %s36 = scalar_select %p33, %s34, %s35
      %p39 = pneg %p33
      %p40 = scmp.eq.s32.totalorder %s24, 1
      %p41 = por %p39, %p40
      %p42 = scmp.ne.s32.totalorder %s34, %s37
      %p43 = scmp.eq.s32.totalorder %s24, 0
      %p44 = por %p42, %p43
      %p45 = scmp.ne.s32.totalorder %s34, %s37
      %p46 = scmp.eq.s32.totalorder %s29, 1
      %p47 = por %p45, %p46
      %p48 = scmp.ne.s32.totalorder %s37, %s38
      %p49 = scmp.eq.s32.totalorder %s29, 0
      %p50 = por %p48, %p49
      %p51 = scmp.ne.s32.totalorder %s37, %s38
      %p52 = scmp.eq.s32.totalorder %s30, 1
      %p53 = por %p51, %p52
      %p55 = scmp.ne.s32.totalorder %s38, %s54
      %p56 = scmp.eq.s32.totalorder %s30, 0
      %p57 = por %p55, %p56
      %s58 = ssub.s32 %s24, %s31
      %p59 = scmp.eq.s32.totalorder %s58, 0
      %s61 = sadd.s32 %s60, 1
      %s62 = scalar_select %p59, %s60, %s61
      %p65 = pneg %p59
      %p66 = scmp.eq.s32.totalorder %s24, 1
      %p67 = por %p65, %p66
      %p68 = scmp.ne.s32.totalorder %s60, %s63
      %p69 = scmp.eq.s32.totalorder %s24, 0
      %p70 = por %p68, %p69
      %p71 = scmp.ne.s32.totalorder %s60, %s63
      %p72 = scmp.eq.s32.totalorder %s29, 1
      %p73 = por %p71, %p72
      %p74 = scmp.ne.s32.totalorder %s63, %s64
      %p75 = scmp.eq.s32.totalorder %s29, 0
      %p76 = por %p74, %p75
      %p77 = scmp.ne.s32.totalorder %s63, %s64
      %p78 = scmp.eq.s32.totalorder %s30, 1
      %p79 = por %p77, %p78
      %p81 = scmp.ne.s32.totalorder %s64, %s80
      %p82 = scmp.eq.s32.totalorder %s30, 0
      %p83 = por %p81, %p82
      %s85 = sadd.s32 %s84, 1
      %p88 = scmp.eq.s32.totalorder %s24, 1
      %p89 = scmp.ne.s32.totalorder %s84, %s86
      %p90 = scmp.eq.s32.totalorder %s24, 0
      %p91 = por %p89, %p90
      %p92 = scmp.ne.s32.totalorder %s84, %s86
      %p93 = scmp.eq.s32.totalorder %s29, 1
      %p94 = por %p92, %p93
      %p95 = scmp.ne.s32.totalorder %s86, %s87
      %p96 = scmp.eq.s32.totalorder %s29, 0
      %p97 = por %p95, %p96
      %p98 = scmp.ne.s32.totalorder %s86, %s87
      %p99 = scmp.eq.s32.totalorder %s30, 1
      %p100 = por %p98, %p99
      %p102 = scmp.ne.s32.totalorder %s87, %s101
      %p103 = scmp.eq.s32.totalorder %s30, 0
      %p104 = por %p102, %p103
      %s106 = sadd.s32 %s105, 1
      %p109 = scmp.eq.s32.totalorder %s24, 1
      %p110 = scmp.ne.s32.totalorder %s105, %s107
      %p111 = scmp.eq.s32.totalorder %s24, 0
      %p112 = por %p110, %p111
      %p113 = scmp.ne.s32.totalorder %s105, %s107
      %p114 = scmp.eq.s32.totalorder %s29, 1
      %p115 = por %p113, %p114
      %p116 = scmp.ne.s32.totalorder %s107, %s108
      %p117 = scmp.eq.s32.totalorder %s29, 0
      %p118 = por %p116, %p117
      %p119 = scmp.ne.s32.totalorder %s107, %s108
      %p120 = scmp.eq.s32.totalorder %s30, 1
      %p121 = por %p119, %p120
      %p123 = scmp.ne.s32.totalorder %s108, %s122
      %p124 = scmp.eq.s32.totalorder %s30, 0
      %p125 = por %p123, %p124
      %s127 = sadd.s32 %s126, 1
      %p130 = scmp.eq.s32.totalorder %s24, 1
      %p131 = scmp.ne.s32.totalorder %s126, %s128
      %p132 = scmp.eq.s32.totalorder %s24, 0
      %p133 = por %p131, %p132
      %p134 = scmp.ne.s32.totalorder %s126, %s128
      %p135 = scmp.eq.s32.totalorder %s29, 1
      %p136 = por %p134, %p135
      %p137 = scmp.ne.s32.totalorder %s128, %s129
      %p138 = scmp.eq.s32.totalorder %s29, 0
      %p139 = por %p137, %p138
      %p140 = scmp.ne.s32.totalorder %s128, %s129
      %p141 = scmp.eq.s32.totalorder %s30, 1
      %p142 = por %p140, %p141
      %p144 = scmp.ne.s32.totalorder %s129, %s143
      %p145 = scmp.eq.s32.totalorder %s30, 0
      %p146 = por %p144, %p145
      %s148 = sadd.s32 %s147, 1
      %p151 = scmp.eq.s32.totalorder %s24, 1
      %p152 = scmp.ne.s32.totalorder %s147, %s149
      %p153 = scmp.eq.s32.totalorder %s24, 0
      %p154 = por %p152, %p153
      %p155 = scmp.ne.s32.totalorder %s147, %s149
      %p156 = scmp.eq.s32.totalorder %s29, 1
      %p157 = por %p155, %p156
      %p158 = scmp.ne.s32.totalorder %s149, %s150
      %p159 = scmp.eq.s32.totalorder %s29, 0
      %p160 = por %p158, %p159
      %p161 = scmp.ne.s32.totalorder %s149, %s150
      %p162 = scmp.eq.s32.totalorder %s30, 1
      %p163 = por %p161, %p162
      %p165 = scmp.ne.s32.totalorder %s150, %s164
      %p166 = scmp.eq.s32.totalorder %s30, 0
      %p167 = por %p165, %p166
      %s168 = ssub.s32 %s24, %s31
      %p169 = scmp.eq.s32.totalorder %s168, 0
      %s171 = sadd.s32 %s170, 1
      %s172 = scalar_select %p169, %s170, %s171
      %p175 = pneg %p169
      %p176 = scmp.eq.s32.totalorder %s24, 1
      %p177 = por %p175, %p176
      %p178 = scmp.ne.s32.totalorder %s170, %s173
      %p179 = scmp.eq.s32.totalorder %s24, 0
      %p180 = por %p178, %p179
      %p181 = scmp.ne.s32.totalorder %s170, %s173
      %p182 = scmp.eq.s32.totalorder %s29, 1
      %p183 = por %p181, %p182
      %p184 = scmp.ne.s32.totalorder %s173, %s174
      %p185 = scmp.eq.s32.totalorder %s29, 0
      %p186 = por %p184, %p185
      %p187 = scmp.ne.s32.totalorder %s173, %s174
      %p188 = scmp.eq.s32.totalorder %s30, 1
      %p189 = por %p187, %p188
      %p191 = scmp.ne.s32.totalorder %s174, %s190
      %p192 = scmp.eq.s32.totalorder %s30, 0
      %p193 = por %p191, %p192
      %s194 = ssub.s32 %s24, %s31
      %p195 = scmp.eq.s32.totalorder %s194, 0
      %s197 = sadd.s32 %s196, 1
      %s198 = scalar_select %p195, %s196, %s197
      %p201 = pneg %p195
      %p202 = scmp.eq.s32.totalorder %s24, 1
      %p203 = por %p201, %p202
      %p204 = scmp.ne.s32.totalorder %s196, %s199
      %p205 = scmp.eq.s32.totalorder %s24, 0
      %p206 = por %p204, %p205
      %p207 = scmp.ne.s32.totalorder %s196, %s199
      %p208 = scmp.eq.s32.totalorder %s29, 1
      %p209 = por %p207, %p208
      %p210 = scmp.ne.s32.totalorder %s199, %s200
      %p211 = scmp.eq.s32.totalorder %s29, 0
      %p212 = por %p210, %p211
      %p213 = scmp.ne.s32.totalorder %s199, %s200
      %p214 = scmp.eq.s32.totalorder %s30, 1
      %p215 = por %p213, %p214
      %p217 = scmp.ne.s32.totalorder %s200, %s216
      %p218 = scmp.eq.s32.totalorder %s30, 0
      %p219 = por %p217, %p218
      %p220 = scmp.le.s32.totalorder 1, %s24
      %p221 = scmp.lt.s32.totalorder %s24, 3
      %p222 = pnand %p220, %p221
      %p223 = pneg %p222
      // Predicated region
      $region9: #{diffposenet_forward.1} parent=5 // pred_check
        _
      $region10: #{diffposenet_forward.1} parent=5 // pred_check_branch
        %225 = sbr.rel (%p222) target = $region12
      $region11: #{diffposenet_forward.1} parent=5 // pred_region
        %s226 = ssub.s32 %s24, 1
        // Predicated region
        $region13: #{diffposenet_forward.1} parent=11 // pred_check
          %p227 = pneg %p97
        $region14: #{diffposenet_forward.1} parent=11 // pred_check_branch
          %229 = sbr.rel (%p227) target = $region16
        $region15: #{diffposenet_forward.1} parent=11 // pred_region
          %s231 = ssub.s32 32, 32
          %232 = vsyncadd [#allocation5], %s231
          %s234 = sshll.u32 %s2, 4
          %s235 = int_to_ptr.vmem [resolvable:$true] %s234
          %237 = dma.vmem_to_smem %s235, 32, [#allocation8], [#allocation5]
        $region16: #{diffposenet_forward.1} parent=11 // pred_fallthru
          _
        // Predicated region
        $region17: #{diffposenet_forward.1} parent=11 // pred_check
          %p238 = pneg %p118
        $region18: #{diffposenet_forward.1} parent=11 // pred_check_branch
          %240 = sbr.rel (%p238) target = $region20
        $region19: #{diffposenet_forward.1} parent=11 // pred_region
          _
        $region20: #{diffposenet_forward.1} parent=11 // pred_fallthru
          _
        // Predicated region
        $region21: #{diffposenet_forward.1} parent=11 // pred_check
          %p241 = pneg %p139
        $region22: #{diffposenet_forward.1} parent=11 // pred_check_branch
          %243 = sbr.rel (%p241) target = $region24
        $region23: #{diffposenet_forward.1} parent=11 // pred_region
          _
        $region24: #{diffposenet_forward.1} parent=11 // pred_fallthru
          _
        // Predicated region
        $region25: #{diffposenet_forward.1} parent=11 // pred_check
          %p244 = pneg %p160
        $region26: #{diffposenet_forward.1} parent=11 // pred_check_branch
          %246 = sbr.rel (%p244) target = $region28
        $region27: #{diffposenet_forward.1} parent=11 // pred_region
          _
        $region28: #{diffposenet_forward.1} parent=11 // pred_fallthru
          _
      $region12: #{diffposenet_forward.1} parent=5 // pred_fallthru
        _
      %p247 = scmp.lt.s32.totalorder %s24, 2
      // Predicated region
      $region29: #{diffposenet_forward.1} parent=5 // pred_check
        %p248 = pneg %p247
      $region30: #{diffposenet_forward.1} parent=5 // pred_check_branch
        %250 = sbr.rel (%p248) target = $region32
      $region31: #{diffposenet_forward.1} parent=5 // pred_region
        // Predicated region
        $region33: #{diffposenet_forward.1} parent=31 // pred_check
          %p251 = pneg %p44
        $region34: #{diffposenet_forward.1} parent=31 // pred_check_branch
          %253 = sbr.rel (%p251) target = $region36
        $region35: #{diffposenet_forward.1} parent=31 // pred_region
          %s254 = sand.u32 %s34, 1
          %s255 = scalar_lea.sflag [#allocation3], %s254
          %s256 = sand.u32 %s34, 1
          %s257 = smul.addr %s256, 64
          %s258 = scalar_lea.vmem [#allocation2], %s257
          %s260 = ssub.s32 1024, 1024
          %261 = vsyncadd %s255, %s260
          %s262 = smul.addr %s24, 8
          %s263 = smul.addr %s262, 128
          %s264 = scalar_lea.hbm %s0, %s263
          %s265 = sshll.u32 %s258, 4
          %s266 = int_to_ptr.vmem [resolvable:$true] %s265
          %271 = dma.hbm_to_vmem [thread:$0]  %s264, 1024, %s266, %s255, 128, 128, 8
        $region36: #{diffposenet_forward.1} parent=31 // pred_fallthru
          _
        // Predicated region
        $region37: #{diffposenet_forward.1} parent=31 // pred_check
          %p272 = pneg %p70
        $region38: #{diffposenet_forward.1} parent=31 // pred_check_branch
          %274 = sbr.rel (%p272) target = $region40
        $region39: #{diffposenet_forward.1} parent=31 // pred_region
          %s275 = sand.u32 %s60, 1
          %s276 = scalar_lea.sflag [#allocation7], %s275
          %s277 = sand.u32 %s60, 1
          %s278 = smul.addr %s277, 64
          %s279 = scalar_lea.vmem [#allocation6], %s278
          %s281 = ssub.s32 1024, 1024
          %282 = vsyncadd %s276, %s281
          %s283 = smul.addr %s24, 8
          %s284 = smul.addr %s283, 128
          %s285 = scalar_lea.hbm %s1, %s284
          %s286 = sshll.u32 %s279, 4
          %s287 = int_to_ptr.vmem [resolvable:$true] %s286
          %292 = dma.hbm_to_vmem [thread:$0]  %s285, 1024, %s287, %s276, 128, 128, 8
        $region40: #{diffposenet_forward.1} parent=31 // pred_fallthru
          _
      $region32: #{diffposenet_forward.1} parent=5 // pred_fallthru
        _
      %p293 = scmp.le.s32.totalorder 1, %s24
      %p294 = scmp.lt.s32.totalorder %s24, 3
      %p295 = pnand %p293, %p294
      %p296 = pneg %p295
      // Predicated region
      $region41: #{diffposenet_forward.1} parent=5 // pred_check
        _
      $region42: #{diffposenet_forward.1} parent=5 // pred_check_branch
        %298 = sbr.rel (%p295) target = $region44
      $region43: #{diffposenet_forward.1} parent=5 // pred_region
        %s299 = ssub.s32 %s24, 1
        %s300 = sand.u32 %s37, 1
        %s301 = scalar_lea.sflag [#allocation3], %s300
        %s302 = sand.u32 %s37, 1
        %s303 = smul.addr %s302, 64
        %s304 = scalar_lea.vmem [#allocation2], %s303
        // Predicated region
        $region45: #{diffposenet_forward.1} parent=43 // pred_check
          %p305 = pneg %p50
        $region46: #{diffposenet_forward.1} parent=43 // pred_check_branch
          %307 = sbr.rel (%p305) target = $region48
        $region47: #{diffposenet_forward.1} parent=43 // pred_region
          %308 = dma.done %s301, 1024
        $region48: #{diffposenet_forward.1} parent=43 // pred_fallthru
          _
        %s309 = sand.u32 %s63, 1
        %s310 = scalar_lea.sflag [#allocation7], %s309
        %s311 = sand.u32 %s63, 1
        %s312 = smul.addr %s311, 64
        %s313 = scalar_lea.vmem [#allocation6], %s312
        // Predicated region
        $region49: #{diffposenet_forward.1} parent=43 // pred_check
          %p314 = pneg %p76
        $region50: #{diffposenet_forward.1} parent=43 // pred_check_branch
          %316 = sbr.rel (%p314) target = $region52
        $region51: #{diffposenet_forward.1} parent=43 // pred_region
          %317 = dma.done %s310, 1024
        $region52: #{diffposenet_forward.1} parent=43 // pred_fallthru
          _
        // Predicated region
        $region53: #{diffposenet_forward.1} parent=43 // pred_check
          %p318 = pneg %p97
        $region54: #{diffposenet_forward.1} parent=43 // pred_check_branch
          %320 = sbr.rel (%p318) target = $region56
        $region55: #{diffposenet_forward.1} parent=43 // pred_region
          %321 = dma.done [#allocation5], 32
        $region56: #{diffposenet_forward.1} parent=43 // pred_fallthru
          _
        %322 = sfence
        %s323 = sand.u32 %s37, 1
        %s324 = scalar_lea.sflag [#allocation3], %s323
        %s325 = sand.u32 %s37, 1
        %s326 = smul.addr %s325, 64
        %s327 = scalar_lea.vmem [#allocation2], %s326
        %p328 = pneg %p50
        %p329 = pneg %p47
        %s330 = sand.u32 %s63, 1
        %s331 = scalar_lea.sflag [#allocation7], %s330
        %s332 = sand.u32 %s63, 1
        %s333 = smul.addr %s332, 64
        %s334 = scalar_lea.vmem [#allocation6], %s333
        %p335 = pneg %p76
        %p336 = pneg %p73
        %p337 = pneg %p97
        %p338 = pneg %p94
        %p339 = pneg %p118
        %p340 = pneg %p115
        %p341 = pneg %p139
        %p342 = pneg %p136
        %p343 = pneg %p160
        %p344 = pneg %p157
        %p345 = pneg %p186
        %p346 = pneg %p183
        %s347 = sand.u32 %s173, 1
        %s348 = scalar_lea.sflag [#allocation4], %s347
        %s349 = sand.u32 %s173, 1
        %s350 = smul.addr %s349, 32
        %s351 = scalar_lea.vmem [#allocation9], %s350
        %p352 = pneg %p212
        %p353 = pneg %p209
        %p354 = scmp.lt.s32.totalorder %s29, 1
        %s355 = scalar_select %p354, %s29, 1
        %s356 = smul.addr %s355, 2
        %s357 = scalar_lea.vmem %s7, %s356
        %p358 = scmp.lt.s32.totalorder %s29, 1
        %s359 = scalar_select %p358, %s29, 1
        %s360 = smul.addr %s359, 2
        %s361 = scalar_lea.vmem %s7, %s360
        %v362 = vld [vmem:[%s4] sm:$0x1]
        %v363 = vld [vmem:[%s304] sm:$0xff]
        %v364 = vld [vmem:[%s304 + $0x8] sm:$0xff]
        %v365 = vld [vmem:[%s313] sm:$0xff]
        %v366 = vld [vmem:[%s313 + $0x8] sm:$0xff]
        %v367 = vadd.f32 %v363, 0.0
        %v368 = vadd.f32 %v364, 0.0
        %v369 = vadd.f32 %v367, %v365
        %v370 = vadd.f32 %v368, %v366
        %s371 = sld [smem:[#allocation8]]
        %v372 = vstv %s371
        %v373 = vmul.f32 %v372, %v363
        %v374 = vmul.f32 %v372, %v364
        %v375 = vadd.f32 %v373, 0.0
        %v376 = vadd.f32 %v374, 0.0
        %s377 = sld [smem:[#allocation8 + $0x4]]
        %v378 = vstv %s377
        %v379 = vmul.f32 %v378, %v365
        %v380 = vmul.f32 %v378, %v366
        %v381 = vadd.f32 %v375, %v379
        %v382 = vadd.f32 %v376, %v380
        %s383 = sld [smem:[#allocation8 + $0x80]]
        %v384 = vstv %s383
        %v385 = vmul.f32 %v384, %v363
        %v386 = vmul.f32 %v384, %v364
        %v387 = vadd.f32 %v385, 0.0
        %v388 = vadd.f32 %v386, 0.0
        %s389 = sld [smem:[#allocation8 + $0x84]]
        %v390 = vstv %s389
        %v391 = vmul.f32 %v390, %v365
        %v392 = vmul.f32 %v390, %v366
        %v393 = vadd.f32 %v387, %v391
        %v394 = vadd.f32 %v388, %v392
        %vm395 = vcmask 130048
        %v396 = vsel %vm395, %v363, 0.0
        %397 = vadd.xlane.f32.xlu0 %v396
        %v398 = vpop.xlane.xlu0 %397
        %v399 = vsel %vm395, %v364, 0.0
        %400 = vadd.xlane.f32.xlu0 %v399
        %v401 = vpop.xlane.xlu0 %400
        %v402 = vadd.f32 %v398, %v401
        %v403 = vrot.slane %v402, 4
        %v404 = vadd.f32 %v402, %v403
        %v405 = vrot.slane %v404, 2
        %v406 = vadd.f32 %v404, %v405
        %v407 = vrot.slane %v406, 1
        %v408 = vadd.f32 %v406, %v407
        %v409 = vmul.f32 %v408, 0.00390625
        %v410 = vsel %vm395, %v365, 0.0
        %411 = vadd.xlane.f32.xlu0 %v410
        %v412 = vpop.xlane.xlu0 %411
        %v413 = vsel %vm395, %v366, 0.0
        %414 = vadd.xlane.f32.xlu0 %v413
        %v415 = vpop.xlane.xlu0 %414
        %v416 = vadd.f32 %v412, %v415
        %v417 = vrot.slane %v416, 4
        %v418 = vadd.f32 %v416, %v417
        %v419 = vrot.slane %v418, 2
        %v420 = vadd.f32 %v418, %v419
        %v421 = vrot.slane %v420, 1
        %v422 = vadd.f32 %v420, %v421
        %v423 = vmul.f32 %v422, 0.00390625
        %v424 = vld [vmem:[%s3] sm:$0x1]
        %v425 = vmul.f32 %v409, %v424
        %v426 = vadd.f32 %v362, %v425
        %v427 = vld [vmem:[%s3 + $0x4] sm:$0x1]
        %v428 = vmul.f32 %v423, %v427
        %v429 = vadd.f32 %v426, %v428
        %s430 = scalar_lea.vmem %s304, 16 [#allocation2]
        %v431 = vld [vmem:[%s430] sm:$0xff]
        %v432 = vld [vmem:[%s430 + $0x8] sm:$0xff]
        %s433 = scalar_lea.vmem %s313, 16 [#allocation6]
        %v434 = vld [vmem:[%s433] sm:$0xff]
        %v435 = vld [vmem:[%s433 + $0x8] sm:$0xff]
        %v436 = vadd.f32 %v369, %v431
        %v437 = vadd.f32 %v370, %v432
        %v438 = vadd.f32 %v436, %v434
        %v439 = vadd.f32 %v437, %v435
        %s440 = sld [smem:[#allocation8 + $0x1]]
        %v441 = vstv %s440
        %v442 = vmul.f32 %v441, %v431
        %v443 = vmul.f32 %v441, %v432
        %v444 = vadd.f32 %v381, %v442
        %v445 = vadd.f32 %v382, %v443
        %s446 = sld [smem:[#allocation8 + $0x5]]
        %v447 = vstv %s446
        %v448 = vmul.f32 %v447, %v434
        %v449 = vmul.f32 %v447, %v435
        %v450 = vadd.f32 %v444, %v448
        %v451 = vadd.f32 %v445, %v449
        %s452 = sld [smem:[#allocation8 + $0x81]]
        %v453 = vstv %s452
        %v454 = vmul.f32 %v453, %v431
        %v455 = vmul.f32 %v453, %v432
        %v456 = vadd.f32 %v393, %v454
        %v457 = vadd.f32 %v394, %v455
        %s458 = sld [smem:[#allocation8 + $0x85]]
        %v459 = vstv %s458
        %v460 = vmul.f32 %v459, %v434
        %v461 = vmul.f32 %v459, %v435
        %v462 = vadd.f32 %v456, %v460
        %v463 = vadd.f32 %v457, %v461
        %v464 = vsel %vm395, %v431, 0.0
        %465 = vadd.xlane.f32.xlu0 %v464
        %v466 = vpop.xlane.xlu0 %465
        %v467 = vsel %vm395, %v432, 0.0
        %468 = vadd.xlane.f32.xlu0 %v467
        %v469 = vpop.xlane.xlu0 %468
        %v470 = vadd.f32 %v466, %v469
        %v471 = vrot.slane %v470, 4
        %v472 = vadd.f32 %v470, %v471
        %v473 = vrot.slane %v472, 2
        %v474 = vadd.f32 %v472, %v473
        %v475 = vrot.slane %v474, 1
        %v476 = vadd.f32 %v474, %v475
        %v477 = vmul.f32 %v476, 0.00390625
        %v478 = vsel %vm395, %v434, 0.0
        %479 = vadd.xlane.f32.xlu0 %v478
        %v480 = vpop.xlane.xlu0 %479
        %v481 = vsel %vm395, %v435, 0.0
        %482 = vadd.xlane.f32.xlu0 %v481
        %v483 = vpop.xlane.xlu0 %482
        %v484 = vadd.f32 %v480, %v483
        %v485 = vrot.slane %v484, 4
        %v486 = vadd.f32 %v484, %v485
        %v487 = vrot.slane %v486, 2
        %v488 = vadd.f32 %v486, %v487
        %v489 = vrot.slane %v488, 1
        %v490 = vadd.f32 %v488, %v489
        %v491 = vmul.f32 %v490, 0.00390625
        %v492 = vld [vmem:[%s3 + $0x1] sm:$0x1]
        %v493 = vmul.f32 %v477, %v492
        %v494 = vadd.f32 %v429, %v493
        %v495 = vld [vmem:[%s3 + $0x5] sm:$0x1]
        %v496 = vmul.f32 %v491, %v495
        %v497 = vadd.f32 %v494, %v496
        %s498 = scalar_lea.vmem %s304, 32 [#allocation2]
        %v499 = vld [vmem:[%s498] sm:$0xff]
        %v500 = vld [vmem:[%s498 + $0x8] sm:$0xff]
        %s501 = scalar_lea.vmem %s313, 32 [#allocation6]
        %v502 = vld [vmem:[%s501] sm:$0xff]
        %v503 = vld [vmem:[%s501 + $0x8] sm:$0xff]
        %v504 = vadd.f32 %v438, %v499
        %v505 = vadd.f32 %v439, %v500
        %v506 = vadd.f32 %v504, %v502
        %v507 = vadd.f32 %v505, %v503
        %s508 = sld [smem:[#allocation8 + $0x2]]
        %v509 = vstv %s508
        %v510 = vmul.f32 %v509, %v499
        %v511 = vmul.f32 %v509, %v500
        %v512 = vadd.f32 %v450, %v510
        %v513 = vadd.f32 %v451, %v511
        %s514 = sld [smem:[#allocation8 + $0x6]]
        %v515 = vstv %s514
        %v516 = vmul.f32 %v515, %v502
        %v517 = vmul.f32 %v515, %v503
        %v518 = vadd.f32 %v512, %v516
        %v519 = vadd.f32 %v513, %v517
        %s520 = sld [smem:[#allocation8 + $0x82]]
        %v521 = vstv %s520
        %v522 = vmul.f32 %v521, %v499
        %v523 = vmul.f32 %v521, %v500
        %v524 = vadd.f32 %v462, %v522
        %v525 = vadd.f32 %v463, %v523
        %s526 = sld [smem:[#allocation8 + $0x86]]
        %v527 = vstv %s526
        %v528 = vmul.f32 %v527, %v502
        %v529 = vmul.f32 %v527, %v503
        %v530 = vadd.f32 %v524, %v528
        %v531 = vadd.f32 %v525, %v529
        %v532 = vsel %vm395, %v499, 0.0
        %533 = vadd.xlane.f32.xlu0 %v532
        %v534 = vpop.xlane.xlu0 %533
        %v535 = vsel %vm395, %v500, 0.0
        %536 = vadd.xlane.f32.xlu0 %v535
        %v537 = vpop.xlane.xlu0 %536
        %v538 = vadd.f32 %v534, %v537
        %v539 = vrot.slane %v538, 4
        %v540 = vadd.f32 %v538, %v539
        %v541 = vrot.slane %v540, 2
        %v542 = vadd.f32 %v540, %v541
        %v543 = vrot.slane %v542, 1
        %v544 = vadd.f32 %v542, %v543
        %v545 = vmul.f32 %v544, 0.00390625
        %v546 = vsel %vm395, %v502, 0.0
        %547 = vadd.xlane.f32.xlu0 %v546
        %v548 = vpop.xlane.xlu0 %547
        %v549 = vsel %vm395, %v503, 0.0
        %550 = vadd.xlane.f32.xlu0 %v549
        %v551 = vpop.xlane.xlu0 %550
        %v552 = vadd.f32 %v548, %v551
        %v553 = vrot.slane %v552, 4
        %v554 = vadd.f32 %v552, %v553
        %v555 = vrot.slane %v554, 2
        %v556 = vadd.f32 %v554, %v555
        %v557 = vrot.slane %v556, 1
        %v558 = vadd.f32 %v556, %v557
        %v559 = vmul.f32 %v558, 0.00390625
        %v560 = vld [vmem:[%s3 + $0x2] sm:$0x1]
        %v561 = vmul.f32 %v545, %v560
        %v562 = vadd.f32 %v497, %v561
        %v563 = vld [vmem:[%s3 + $0x6] sm:$0x1]
        %v564 = vmul.f32 %v559, %v563
        %v565 = vadd.f32 %v562, %v564
        %s566 = scalar_lea.vmem %s304, 48 [#allocation2]
        %v567 = vld [vmem:[%s566] sm:$0xff]
        %v568 = vld [vmem:[%s566 + $0x8] sm:$0xff]
        %s569 = scalar_lea.vmem %s313, 48 [#allocation6]
        %v570 = vld [vmem:[%s569] sm:$0xff]
        %v571 = vld [vmem:[%s569 + $0x8] sm:$0xff]
        %v572 = vadd.f32 %v506, %v567
        %v573 = vadd.f32 %v507, %v568
        %v574 = vadd.f32 %v572, %v570
        %v575 = vadd.f32 %v573, %v571
        %s576 = sld [smem:[#allocation8 + $0x3]]
        %v577 = vstv %s576
        %v578 = vmul.f32 %v577, %v567
        %v579 = vmul.f32 %v577, %v568
        %v580 = vadd.f32 %v518, %v578
        %v581 = vadd.f32 %v519, %v579
        %s582 = sld [smem:[#allocation8 + $0x7]]
        %v583 = vstv %s582
        %v584 = vmul.f32 %v583, %v570
        %v585 = vmul.f32 %v583, %v571
        %v586 = vadd.f32 %v580, %v584
        %v587 = vadd.f32 %v581, %v585
        %s588 = sld [smem:[#allocation8 + $0x83]]
        %v589 = vstv %s588
        %v590 = vmul.f32 %v589, %v567
        %v591 = vmul.f32 %v589, %v568
        %v592 = vadd.f32 %v530, %v590
        %v593 = vadd.f32 %v531, %v591
        %s594 = sld [smem:[#allocation8 + $0x87]]
        %v595 = vstv %s594
        %v596 = vmul.f32 %v595, %v570
        %v597 = vmul.f32 %v595, %v571
        %v598 = vadd.f32 %v592, %v596
        %v599 = vadd.f32 %v593, %v597
        %v600 = vsel %vm395, %v567, 0.0
        %601 = vadd.xlane.f32.xlu0 %v600
        %v602 = vpop.xlane.xlu0 %601
        %v603 = vsel %vm395, %v568, 0.0
        %604 = vadd.xlane.f32.xlu0 %v603
        %v605 = vpop.xlane.xlu0 %604
        %v606 = vadd.f32 %v602, %v605
        %v607 = vrot.slane %v606, 4
        %v608 = vadd.f32 %v606, %v607
        %v609 = vrot.slane %v608, 2
        %v610 = vadd.f32 %v608, %v609
        %v611 = vrot.slane %v610, 1
        %v612 = vadd.f32 %v610, %v611
        %v613 = vmul.f32 %v612, 0.00390625
        %v614 = vsel %vm395, %v570, 0.0
        %615 = vadd.xlane.f32.xlu0 %v614
        %v616 = vpop.xlane.xlu0 %615
        %v617 = vsel %vm395, %v571, 0.0
        %618 = vadd.xlane.f32.xlu0 %v617
        %v619 = vpop.xlane.xlu0 %618
        %v620 = vadd.f32 %v616, %v619
        %v621 = vrot.slane %v620, 4
        %v622 = vadd.f32 %v620, %v621
        %v623 = vrot.slane %v622, 2
        %v624 = vadd.f32 %v622, %v623
        %v625 = vrot.slane %v624, 1
        %v626 = vadd.f32 %v624, %v625
        %v627 = vmul.f32 %v626, 0.00390625
        %v628 = vld [vmem:[%s3 + $0x3] sm:$0x1]
        %v629 = vmul.f32 %v613, %v628
        %v630 = vadd.f32 %v565, %v629
        %v631 = vld [vmem:[%s3 + $0x7] sm:$0x1]
        %v632 = vmul.f32 %v627, %v631
        %v633 = vadd.f32 %v630, %v632
        %v634 = vmul.f32 %v574, 0.125
        %v635 = vmul.f32 %v575, 0.125
        %v636 = vtanh.pop %v586
        %v637 = vtanh.pop %v587
        %v638 = vtanh.pop %v598
        %v639 = vtanh.pop %v599
        %640 = vst.msk [vmem:[%s351] sm:$0xff] %vm395, %v636
        %641 = vst.msk [vmem:[%s351 + $0x8] sm:$0xff] %vm395, %v637
        %s642 = scalar_lea.vmem %s351, 16 [#allocation9]
        %643 = vst.msk [vmem:[%s642] sm:$0xff] %vm395, %v638
        %644 = vst.msk [vmem:[%s642 + $0x8] sm:$0xff] %vm395, %v639
        %647 = vrot.lane.b32.xlu0 %v634, 1
        %v648 = vpop.permute.xlu0 %647
        %649 = vrot.lane.b32.xlu0 %v635, 1
        %v650 = vpop.permute.xlu0 %649
        %vm653 = vcmask 7168
        %v654 = vsel %vm653, 0.0, %v648
        %v655 = vsel %vm653, 0.0, %v650
        %656 = vrot.lane.b32.xlu0 %v634, 127
        %v657 = vpop.permute.xlu0 %656
        %658 = vrot.lane.b32.xlu0 %v635, 127
        %v659 = vpop.permute.xlu0 %658
        %vm662 = vcmask 121856
        %v663 = vsel %vm662, %v657, 0.0
        %v664 = vsel %vm662, %v659, 0.0
        %v665 = vsub.f32 %v663, %v654
        %v666 = vsub.f32 %v664, %v655
        %v667 = vmul.f32 %v634, 2.0
        %v668 = vmul.f32 %v635, 2.0
        %v669 = vadd.f32 %v654, %v667
        %v670 = vadd.f32 %v655, %v668
        %v671 = vadd.f32 %v669, %v663
        %v672 = vadd.f32 %v670, %v664
        %vm675 = vcmask 1040384
        %v676 = vrot.slane %v665, 7
        %v677 = vrot.slane %v666, 7
        %v678 = vsel %vm675, %v676, %v677
        %v681 = vsel %vm675, 0.0, %v676
        %v682 = vmul.f32 %v665, 2.0
        %v683 = vmul.f32 %v666, 2.0
        %v684 = vadd.f32 %v681, %v682
        %v685 = vadd.f32 %v678, %v683
        %vm686 = vcmask 1046528
        %v687 = vrot.slane %v665, 1
        %v688 = vrot.slane %v666, 1
        %v689 = vsel %vm686, %v687, %v688
        %v692 = vsel %vm686, %v688, 0.0
        %v693 = vadd.f32 %v684, %v689
        %v694 = vadd.f32 %v685, %v692
        %v697 = vrot.slane %v671, 1
        %v698 = vrot.slane %v672, 1
        %v699 = vsel %vm686, %v697, %v698
        %v702 = vsel %vm686, %v698, 0.0
        %v703 = vrot.slane %v671, 7
        %v704 = vrot.slane %v672, 7
        %v705 = vsel %vm675, %v703, %v704
        %v708 = vsel %vm675, 0.0, %v703
        %v709 = vsub.f32 %v699, %v708
        %v710 = vsub.f32 %v702, %v705
        %v711 = vmul.f32 %v636, %v693
        %v712 = vmul.f32 %v637, %v694
        %v713 = vsel %vm395, %v711, 0.0
        %714 = vadd.xlane.f32.xlu0 %v713
        %v715 = vpop.xlane.xlu0 %714
        %v716 = vsel %vm395, %v712, 0.0
        %717 = vadd.xlane.f32.xlu0 %v716
        %v718 = vpop.xlane.xlu0 %717
        %v719 = vadd.f32 %v715, %v718
        %v720 = vrot.slane %v719, 4
        %v721 = vadd.f32 %v719, %v720
        %v722 = vrot.slane %v721, 2
        %v723 = vadd.f32 %v721, %v722
        %v724 = vrot.slane %v723, 1
        %v725 = vadd.f32 %v723, %v724
        %v726 = vmul.f32 %v725, 0.00390625
        %v727 = vmul.f32 %v638, %v709
        %v728 = vmul.f32 %v639, %v710
        %v729 = vsel %vm395, %v727, 0.0
        %730 = vadd.xlane.f32.xlu0 %v729
        %v731 = vpop.xlane.xlu0 %730
        %v732 = vsel %vm395, %v728, 0.0
        %733 = vadd.xlane.f32.xlu0 %v732
        %v734 = vpop.xlane.xlu0 %733
        %v735 = vadd.f32 %v731, %v734
        %v736 = vrot.slane %v735, 4
        %v737 = vadd.f32 %v735, %v736
        %v738 = vrot.slane %v737, 2
        %v739 = vadd.f32 %v737, %v738
        %v740 = vrot.slane %v739, 1
        %v741 = vadd.f32 %v739, %v740
        %v742 = vmul.f32 %v741, 0.00390625
        %v743 = vld [vmem:[%s5] sm:$0x1]
        %v744 = vmul.f32 %v726, %v743
        %v745 = vld [vmem:[%s5 + $0x1] sm:$0x1]
        %v746 = vmul.f32 %v742, %v745
        %v747 = vadd.f32 %v744, %v746
        %v748 = vtanh.pop %v747
        %v749 = vmul.f32 %v748, 0.01
        %v750 = vadd.f32 %v633, %v749
        %v752 = vlaneseq
        %v753 = vshrl.u32 %v752, 7
        %v754 = vsub.s32 0, %v753
        %v755 = vrot.slane %v750, %v754
        %v757 = vsel %vm675, %v633, %v755
        %vm758 = vcmask 41984
        %759 = vst.msk [vmem:[%s361] sm:$0x3] %vm758, %v757
        %s760 = sand.u32 %s173, 1
        %s761 = scalar_lea.sflag [#allocation4], %s760
        %s762 = sand.u32 %s173, 1
        %s763 = smul.addr %s762, 32
        %s764 = scalar_lea.vmem [#allocation9], %s763
        %p765 = scmp.lt.s32.totalorder %s29, 1
        %s766 = scalar_select %p765, %s29, 1
        %s767 = smul.addr %s766, 2
        %s768 = scalar_lea.vmem %s7, %s767
        // Predicated region
        $region57: #{diffposenet_forward.1} parent=43 // pred_check
          %p769 = pneg %p183
        $region58: #{diffposenet_forward.1} parent=43 // pred_check_branch
          %771 = sbr.rel (%p769) target = $region60
        $region59: #{diffposenet_forward.1} parent=43 // pred_region
          %s773 = ssub.s32 512, 512
          %774 = vsyncadd %s761, %s773
          %s775 = smul.addr %s29, 4
          %s776 = smul.addr %s775, 128
          %s777 = scalar_lea.hbm %s6, %s776
          %s778 = sshll.u32 %s764, 4
          %s779 = int_to_ptr.vmem [resolvable:$true] %s778
          %784 = dma.vmem_to_hbm [thread:$0]  %s779, 512, %s777, %s761, 128, 128, 8
        $region60: #{diffposenet_forward.1} parent=43 // pred_fallthru
          _
        // Predicated region
        $region61: #{diffposenet_forward.1} parent=43 // pred_check
          %p785 = pneg %p209
        $region62: #{diffposenet_forward.1} parent=43 // pred_check_branch
          %787 = sbr.rel (%p785) target = $region64
        $region63: #{diffposenet_forward.1} parent=43 // pred_region
          _
        $region64: #{diffposenet_forward.1} parent=43 // pred_fallthru
          _
      $region44: #{diffposenet_forward.1} parent=5 // pred_fallthru
        _
      %p788 = scmp.le.s32.totalorder 2, %s24
      // Predicated region
      $region65: #{diffposenet_forward.1} parent=5 // pred_check
        %p789 = pneg %p788
      $region66: #{diffposenet_forward.1} parent=5 // pred_check_branch
        %791 = sbr.rel (%p789) target = $region68
      $region67: #{diffposenet_forward.1} parent=5 // pred_region
        %s792 = ssub.s32 %s24, 2
        // Predicated region
        $region69: #{diffposenet_forward.1} parent=67 // pred_check
          %p793 = pneg %p189
        $region70: #{diffposenet_forward.1} parent=67 // pred_check_branch
          %795 = sbr.rel (%p793) target = $region72
        $region71: #{diffposenet_forward.1} parent=67 // pred_region
          %s796 = sand.u32 %s174, 1
          %s797 = scalar_lea.sflag [#allocation4], %s796
          %s798 = sand.u32 %s174, 1
          %s799 = smul.addr %s798, 32
          %s800 = scalar_lea.vmem [#allocation9], %s799
          %801 = dma.done %s797, 512
        $region72: #{diffposenet_forward.1} parent=67 // pred_fallthru
          _
        // Predicated region
        $region73: #{diffposenet_forward.1} parent=67 // pred_check
          %p802 = pneg %p215
        $region74: #{diffposenet_forward.1} parent=67 // pred_check_branch
          %804 = sbr.rel (%p802) target = $region76
        $region75: #{diffposenet_forward.1} parent=67 // pred_region
          %p805 = scmp.lt.s32.totalorder %s30, 1
          %s806 = scalar_select %p805, %s30, 1
          %s807 = smul.addr %s806, 2
          %s808 = scalar_lea.vmem %s7, %s807
        $region76: #{diffposenet_forward.1} parent=67 // pred_fallthru
          _
      $region68: #{diffposenet_forward.1} parent=5 // pred_fallthru
        _
    $region6: #{diffposenet_forward.1} parent=1 // loop_footer
      %s28 = sadd.s32 1, %s24
    $region7: #{diffposenet_forward.1} parent=1 // loop_footer_branch
      %23 = sbr.rel target = $region3
    $region8: #{diffposenet_forward.1} parent=1 // loop_exit
      _
    %809 = vsyncpa [#allocation3], 1
    %s810 = scalar_lea.sflag [#allocation3], 1
    %811 = vsyncpa %s810, 1
    %812 = vsyncpa [#allocation7], 1
    %s813 = scalar_lea.sflag [#allocation7], 1
    %814 = vsyncpa %s813, 1
    %815 = vsyncpa [#allocation4], 1
    %s816 = scalar_lea.sflag [#allocation4], 1
    %817 = vsyncpa %s816, 1
    %818 = vsyncpa [#allocation5], 1
    %s819 = scalar_lea.sflag [#allocation5], 1
    %820 = vsyncpa %s819, 1

</llo_original>
